<compile_context>
chip_gen: v7x
topology: tpu7x:2x2x1
jax: 0.10.0
libtpu: 0.0.40
codegen_flags: <defaults>
</compile_context>

<pallas_src>
import functools

import numpy as np

import jax
import jax.numpy as jnp
from jax.experimental import pallas as pl
from jax.experimental.pallas import tpu as pltpu


# ----------------------------------------------------------------------------
# Pre-packed operands (built ONCE, off the hot path)
# ----------------------------------------------------------------------------
@functools.lru_cache(maxsize=None)
def _upsample_pad_matrix(t_in, factor, pad):
    """0/1 matrix U [T_in, T_in*factor + 2*pad] with
       (x @ U)[ci, s] = x[ci, (s - pad)//factor] inside the padded window, 0 outside.
    Built with numpy -> becomes a compile-time constant; 0/1 is exact in bf16."""
    t_out = t_in * factor + 2 * pad
    s = np.arange(t_out) - pad
    valid = (s >= 0) & (s < t_in * factor)
    src = np.where(valid, s // factor, -1)
    m = (np.arange(t_in)[:, None] == src[None, :]).astype(np.float32)
    return jnp.asarray(m, dtype=jnp.bfloat16)


def make_upsample_params(key, channels, use_conv, out_channels=None, ksize=5):
    out_channels = out_channels or channels
    params = {}
    if use_conv:
        kw, kb = jax.random.split(key)
        w = 0.1 * jax.random.normal(kw, (out_channels, channels, ksize), jnp.float32)
        b = 0.05 * jax.random.normal(kb, (out_channels,), jnp.float32)
        params['w'] = w                       # PyTorch layout (reference path)
        params['b'] = b
        # Kernel-layout operands, packed once here (not per forward call):
        #   w2[co, k*C_in + ci] = w[co, ci, k], pre-cast to bf16 (1 MXU pass).
        params['w2'] = (jnp.transpose(w, (0, 2, 1))
                        .reshape(out_channels, channels * ksize)
                        .astype(jnp.bfloat16))
        params['b2'] = b.reshape(out_channels, 1)
    return params


# ----------------------------------------------------------------------------
# Fused Pallas kernel: nearest upsample + zero pad + Conv1d, one batch per step
# ----------------------------------------------------------------------------
def _upsample_conv_kernel(x_ref, u_ref, w2_ref, b_ref, o_ref, xpad_scr, xcol_scr,
                          *, c_in, t_up, ksize):
    """
    x_ref:    [1, C_in, T_in]  f32   (one batch element per grid step)
    u_ref:    [T_in, T_up+2p]  bf16  pre-packed upsample+pad selection matrix
    w2_ref:   [C_out, K*C_in]  bf16  im2col-packed conv weight
    b_ref:    [C_out, 1]       f32
    o_ref:    [1, C_out, T_up] f32   (final module layout -- no post-transpose)
    xpad_scr: [C_in, T_up+2p]  bf16  upsampled + zero-padded activations
    xcol_scr: [K*C_in, T_up]   bf16  im2col operand
    """
    # (1) Nearest upsample + zero pad via ONE tiny MXU matmul against the
    #     pre-packed 0/1 matrix (exact copy of bf16(x); no in-kernel iotas).
    xb = x_ref[0].astype(jnp.bfloat16)                          # (C_in, T_in)
    xpad_scr[...] = jnp.dot(
        xb, u_ref[...], preferred_element_type=jnp.float32).astype(jnp.bfloat16)

    # (2) im2col: K static slice copies. Stores are aligned (sublane offset
    #     k*C_in, lane offset 0); reads are cheap static lane rotates by k.
    for k in range(ksize):
        xcol_scr[k * c_in:(k + 1) * c_in, :] = xpad_scr[:, k:k + t_up]

    # (3) Whole convolution = ONE bf16 MXU matmul, f32 accumulation, output
    #     written straight into the (1, C_out, T_up) block.
    acc = jnp.dot(w2_ref[...], xcol_scr[...], preferred_element_type=jnp.float32)
    o_ref[0] = (acc + b_ref[...]).astype(o_ref.dtype)


# ----------------------------------------------------------------------------
# Forward (Pallas for use_conv=True, fused XLA data movement otherwise)
# ----------------------------------------------------------------------------
def upsample_forward(params, x, *, channels, use_conv, factor=4, ksize=5, pad=2):
    assert x.shape[1] == channels
    n, c_in, t_in = x.shape
    t_up = t_in * factor

    if not use_conv:
        # Pure data movement: one fused, mem-bound XLA broadcast+reshape.
        # A Pallas launch (and an MXU selection matmul) here is pure overhead.
        return jnp.repeat(x, factor, axis=-1)

    u = _upsample_pad_matrix(t_in, factor, pad)      # [T_in, T_up+2p] bf16 const
    w2, b2 = params['w2'], params['b2']
    c_out = w2.shape[0]

    flops = 2 * n * (c_in * t_in * (t_up + 2 * pad)          # upsample matmul
                     + c_out * ksize * c_in * t_up)          # conv matmul
    bytes_accessed = (x.size * 4 + u.size * 2 + w2.size * 2 + b2.size * 4
                      + n * c_out * t_up * 4)

    kern = functools.partial(_upsample_conv_kernel, c_in=c_in, t_up=t_up, ksize=ksize)
    out = pl.pallas_call(
        kern,
        out_shape=jax.ShapeDtypeStruct((n, c_out, t_up), jnp.float32),
        grid=(n,),
        in_specs=[
            pl.BlockSpec((1, c_in, t_in), lambda i: (i, 0, 0)),
            pl.BlockSpec((t_in, t_up + 2 * pad), lambda i: (0, 0)),
            pl.BlockSpec((c_out, c_in * ksize), lambda i: (0, 0)),
            pl.BlockSpec((c_out, 1), lambda i: (0, 0)),
        ],
        out_specs=pl.BlockSpec((1, c_out, t_up), lambda i: (i, 0, 0)),
        scratch_shapes=[
            pltpu.VMEM((c_in, t_up + 2 * pad), jnp.bfloat16),   # upsampled+padded acts
            pltpu.VMEM((c_in * ksize, t_up), jnp.bfloat16),     # im2col operand
        ],
        compiler_params=pltpu.CompilerParams(
            dimension_semantics=("parallel",),
            vmem_limit_bytes=32 * 1024 * 1024),
        cost_estimate=pl.CostEstimate(flops=flops, transcendentals=0,
                                      bytes_accessed=bytes_accessed),
    )(x, u, w2, b2)
    return out                                    # already [N, C_out, T_up]


# ----------------------------------------------------------------------------
# Pure-JAX references
# ----------------------------------------------------------------------------
def ref_upsample_forward(w, b, x, factor=4, pad=2):
    x_up = jnp.repeat(x, factor, axis=-1)         # F.interpolate(..., 'nearest')
    out = jax.lax.conv_general_dilated(
        x_up, w, window_strides=(1,), padding=[(pad, pad)],
        dimension_numbers=('NCH', 'OIH', 'NCH'),
        precision=jax.lax.Precision.HIGHEST)
    return out + b[None, :, None]


# ----------------------------------------------------------------------------
# Main
# ----------------------------------------------------------------------------
if __name__ == "__main__":
    key = jax.random.PRNGKey(0)
    kx, kp = jax.random.split(key)

    # Upsample(channels=32, use_conv=True, out_channels=48, factor=4)
    N, C, T = 2, 32, 16
    C_OUT = 48
    FACTOR, KSIZE, PAD = 4, 5, 2

    x = jax.random.normal(kx, (N, C, T), jnp.float32)
    params = make_upsample_params(kp, C, True, out_channels=C_OUT, ksize=KSIZE)

    # ---- use_conv=True path (fused Pallas kernel) ---------------------------
    fwd = jax.jit(functools.partial(upsample_forward, channels=C, use_conv=True,
                                    factor=FACTOR, ksize=KSIZE, pad=PAD))
    out = jax.block_until_ready(fwd(params, x))
    assert out.shape == (N, C_OUT, T * FACTOR), out.shape

    # (a) Algorithm check against a bf16-operand-matched reference (tight tol:
    #     only f32 accumulation-order noise should remain).
    x_bf = x.astype(jnp.bfloat16).astype(jnp.float32)
    w_bf = params['w'].astype(jnp.bfloat16).astype(jnp.float32)
    ref_match = ref_upsample_forward(w_bf, params['b'], x_bf, FACTOR, PAD)
    err_match = float(jnp.max(jnp.abs(out - ref_match)))
    if err_match > 2e-3:
        raise AssertionError(f"use_conv=True algorithm mismatch: max abs err = {err_match}")

    # (b) End-to-end accuracy vs full-f32 reference. The kernel uses bf16 MXU
    #     operands (single pass, per perf review), so allow bf16 rounding.
    ref = ref_upsample_forward(params['w'], params['b'], x, FACTOR, PAD)
    err = float(jnp.max(jnp.abs(out - ref)))
    if err > 5e-2:
        raise AssertionError(f"use_conv=True accuracy mismatch: max abs err = {err}")

    # ---- use_conv=False path (pure XLA data movement, per perf review) ------
    fwd_nc = jax.jit(functools.partial(upsample_forward, channels=C, use_conv=False,
                                       factor=FACTOR))
    out_nc = jax.block_until_ready(fwd_nc({}, x))
    ref_nc = jnp.broadcast_to(x[..., None], (N, C, T, FACTOR)).reshape(N, C, T * FACTOR)
    assert out_nc.shape == (N, C, T * FACTOR), out_nc.shape
    err_nc = float(jnp.max(jnp.abs(out_nc - ref_nc)))
    if err_nc > 0.0:
        raise AssertionError(f"use_conv=False mismatch: max abs err = {err_nc}")

    print("KERNEL_OK")
</pallas_src>

<mosaic_0001>
module attributes {stable_mosaic.version = 11 : i64} {
  func.func @_upsample_conv_kernel(%arg0: i32, %arg1: memref<1x32x16xf32, #tpu.memory_space<vmem>>, %arg2: memref<16x68xbf16, #tpu.memory_space<vmem>>, %arg3: memref<48x160xbf16, #tpu.memory_space<vmem>>, %arg4: memref<48x1xf32, #tpu.memory_space<vmem>>, %arg5: memref<1x48x64xf32, #tpu.memory_space<vmem>>, %arg6: memref<32x68xbf16, #tpu.memory_space<vmem>>, %arg7: memref<160x64xbf16, #tpu.memory_space<vmem>>) attributes {dimension_semantics = [#tpu.dimension_semantics<parallel>], iteration_bounds = array<i64: 2>, scalar_prefetch = 0 : i64, scratch_operands = 2 : i64, tpu.core_type = #tpu.core_type<tc>, window_params = [{transform_indices = @transform_0, window_bounds = array<i64: 1, 32, 16>}, {pipeline_mode = #tpu.pipeline_mode<synchronous>, transform_indices = @transform_1, window_bounds = array<i64: 16, 68>}, {pipeline_mode = #tpu.pipeline_mode<synchronous>, transform_indices = @transform_2, window_bounds = array<i64: 48, 160>}, {pipeline_mode = #tpu.pipeline_mode<synchronous>, transform_indices = @transform_3, window_bounds = array<i64: 48, 1>}, {transform_indices = @transform_4, window_bounds = array<i64: 1, 48, 64>}]} {
    %c0 = arith.constant 0 : index
    %c0_0 = arith.constant 0 : index
    %c0_1 = arith.constant 0 : index
    %0 = vector.load %arg1[%c0, %c0_0, %c0_1] : memref<1x32x16xf32, #tpu.memory_space<vmem>>, vector<1x32x16xf32>
    %1 = vector.shape_cast %0 : vector<1x32x16xf32> to vector<32x16xf32>
    %2 = arith.truncf %1 : vector<32x16xf32> to vector<32x16xbf16>
    %c0_2 = arith.constant 0 : index
    %c0_3 = arith.constant 0 : index
    %3 = vector.load %arg2[%c0_2, %c0_3] : memref<16x68xbf16, #tpu.memory_space<vmem>>, vector<16x68xbf16>
    %cst = arith.constant dense<0.000000e+00> : vector<32x68xf32>
    %4 = tpu.matmul %2, %3, %cst {dimension_numbers = #tpu.dot_dimension_numbers<[1], [0], [0], [1], [0, 0, 1, 1], [], []>} : vector<32x16xbf16>, vector<16x68xbf16>, vector<32x68xf32> -> vector<32x68xf32>
    %5 = arith.truncf %4 : vector<32x68xf32> to vector<32x68xbf16>
    %c0_4 = arith.constant 0 : index
    %c0_5 = arith.constant 0 : index
    %6 = vector.load %arg6[%c0_4, %c0_5] : memref<32x68xbf16, #tpu.memory_space<vmem>>, vector<32x68xbf16>
    tpu.vector_store %arg6[%c0_4, %c0_5], %5 {strides = array<i32>} : memref<32x68xbf16, #tpu.memory_space<vmem>>, vector<32x68xbf16>,
    %c0_6 = arith.constant 0 : index
    %c0_7 = arith.constant 0 : index
    %7 = vector.load %arg6[%c0_6, %c0_7] : memref<32x68xbf16, #tpu.memory_space<vmem>>, vector<32x64xbf16>
    %c0_8 = arith.constant 0 : index
    %c0_9 = arith.constant 0 : index
    %8 = vector.load %arg7[%c0_8, %c0_9] : memref<160x64xbf16, #tpu.memory_space<vmem>>, vector<32x64xbf16>
    tpu.vector_store %arg7[%c0_8, %c0_9], %7 {strides = array<i32>} : memref<160x64xbf16, #tpu.memory_space<vmem>>, vector<32x64xbf16>,
    %c0_10 = arith.constant 0 : index
    %c1 = arith.constant 1 : index
    %9 = vector.load %arg6[%c0_10, %c1] : memref<32x68xbf16, #tpu.memory_space<vmem>>, vector<32x64xbf16>
    %c32 = arith.constant 32 : index
    %c0_11 = arith.constant 0 : index
    %10 = vector.load %arg7[%c32, %c0_11] : memref<160x64xbf16, #tpu.memory_space<vmem>>, vector<32x64xbf16>
    tpu.vector_store %arg7[%c32, %c0_11], %9 {strides = array<i32>} : memref<160x64xbf16, #tpu.memory_space<vmem>>, vector<32x64xbf16>,
    %c0_12 = arith.constant 0 : index
    %c2 = arith.constant 2 : index
    %11 = vector.load %arg6[%c0_12, %c2] : memref<32x68xbf16, #tpu.memory_space<vmem>>, vector<32x64xbf16>
    %c64 = arith.constant 64 : index
    %c0_13 = arith.constant 0 : index
    %12 = vector.load %arg7[%c64, %c0_13] : memref<160x64xbf16, #tpu.memory_space<vmem>>, vector<32x64xbf16>
    tpu.vector_store %arg7[%c64, %c0_13], %11 {strides = array<i32>} : memref<160x64xbf16, #tpu.memory_space<vmem>>, vector<32x64xbf16>,
    %c0_14 = arith.constant 0 : index
    %c3 = arith.constant 3 : index
    %13 = vector.load %arg6[%c0_14, %c3] : memref<32x68xbf16, #tpu.memory_space<vmem>>, vector<32x64xbf16>
    %c96 = arith.constant 96 : index
    %c0_15 = arith.constant 0 : index
    %14 = vector.load %arg7[%c96, %c0_15] : memref<160x64xbf16, #tpu.memory_space<vmem>>, vector<32x64xbf16>
    tpu.vector_store %arg7[%c96, %c0_15], %13 {strides = array<i32>} : memref<160x64xbf16, #tpu.memory_space<vmem>>, vector<32x64xbf16>,
    %c0_16 = arith.constant 0 : index
    %c4 = arith.constant 4 : index
    %15 = vector.load %arg6[%c0_16, %c4] : memref<32x68xbf16, #tpu.memory_space<vmem>>, vector<32x64xbf16>
    %c128 = arith.constant 128 : index
    %c0_17 = arith.constant 0 : index
    %16 = vector.load %arg7[%c128, %c0_17] : memref<160x64xbf16, #tpu.memory_space<vmem>>, vector<32x64xbf16>
    tpu.vector_store %arg7[%c128, %c0_17], %15 {strides = array<i32>} : memref<160x64xbf16, #tpu.memory_space<vmem>>, vector<32x64xbf16>,
    %c0_18 = arith.constant 0 : index
    %c0_19 = arith.constant 0 : index
    %17 = vector.load %arg3[%c0_18, %c0_19] : memref<48x160xbf16, #tpu.memory_space<vmem>>, vector<48x160xbf16>
    %c0_20 = arith.constant 0 : index
    %c0_21 = arith.constant 0 : index
    %18 = vector.load %arg7[%c0_20, %c0_21] : memref<160x64xbf16, #tpu.memory_space<vmem>>, vector<160x64xbf16>
    %cst_22 = arith.constant dense<0.000000e+00> : vector<48x64xf32>
    %19 = tpu.matmul %17, %18, %cst_22 {dimension_numbers = #tpu.dot_dimension_numbers<[1], [0], [0], [1], [0, 0, 1, 1], [], []>} : vector<48x160xbf16>, vector<160x64xbf16>, vector<48x64xf32> -> vector<48x64xf32>
    %c0_23 = arith.constant 0 : index
    %c0_24 = arith.constant 0 : index
    %20 = vector.load %arg4[%c0_23, %c0_24] : memref<48x1xf32, #tpu.memory_space<vmem>>, vector<48x1xf32>
    %21 = vector.broadcast %20 : vector<48x1xf32> to vector<48x64xf32>
    %22 = arith.addf %19, %21 : vector<48x64xf32>
    %c0_25 = arith.constant 0 : index
    %c0_26 = arith.constant 0 : index
    %c0_27 = arith.constant 0 : index
    %23 = vector.load %arg5[%c0_25, %c0_26, %c0_27] : memref<1x48x64xf32, #tpu.memory_space<vmem>>, vector<1x48x64xf32>
    %24 = vector.shape_cast %23 : vector<1x48x64xf32> to vector<48x64xf32>
    %25 = vector.shape_cast %22 : vector<48x64xf32> to vector<1x48x64xf32>
    tpu.vector_store %arg5[%c0_25, %c0_26, %c0_27], %25 {strides = array<i32>} : memref<1x48x64xf32, #tpu.memory_space<vmem>>, vector<1x48x64xf32>,
    return
  }
  func.func @transform_0(%arg0: i32) -> (i32, i32, i32) {
    %c0_i32 = arith.constant 0 : i32
    %c0_i32_0 = arith.constant 0 : i32
    %c0_i32_1 = arith.constant 0 : i32
    return %arg0, %c0_i32, %c0_i32_0 : i32, i32, i32
  }
  func.func @transform_1(%arg0: i32) -> (i32, i32) {
    %c0_i32 = arith.constant 0 : i32
    %c0_i32_0 = arith.constant 0 : i32
    %c0_i32_1 = arith.constant 0 : i32
    return %c0_i32, %c0_i32_0 : i32, i32
  }
  func.func @transform_2(%arg0: i32) -> (i32, i32) {
    %c0_i32 = arith.constant 0 : i32
    %c0_i32_0 = arith.constant 0 : i32
    %c0_i32_1 = arith.constant 0 : i32
    return %c0_i32, %c0_i32_0 : i32, i32
  }
  func.func @transform_3(%arg0: i32) -> (i32, i32) {
    %c0_i32 = arith.constant 0 : i32
    %c0_i32_0 = arith.constant 0 : i32
    %c0_i32_1 = arith.constant 0 : i32
    return %c0_i32, %c0_i32_0 : i32, i32
  }
  func.func @transform_4(%arg0: i32) -> (i32, i32, i32) {
    %c0_i32 = arith.constant 0 : i32
    %c0_i32_0 = arith.constant 0 : i32
    %c0_i32_1 = arith.constant 0 : i32
    return %arg0, %c0_i32, %c0_i32_0 : i32, i32, i32
  }
}

</mosaic_0001>

<llo_original>
// kernel: upsample_forward.1
$region0: #{upsample_forward.1}
  #allocation0 [shape = 'u32[]', space=smem, size = 0x4, offset = 0x4, fixed_abs, tag = 'smem constant byte address 0x4 - core index']
  #allocation1 [shape = 'u32[144,128]{1,0:T(1,128)}', space=vmem, size = 0x12000, scoped, tag = 'internal scratch']
  #allocation2 [shape = 'bf16[32,68]{1,0:T(16,128)(2,1)}', space=vmem, size = 0x2000, scoped, tag = 'scratch operand']
  #allocation3 [shape = 'bf16[160,64]{1,0:T(16,128)(2,1)}', space=vmem, size = 0xa000, scoped, tag = 'scratch operand']
  %s0 = inlined_call_operand.vmem [shape: f32[2,32,16], index: 0, kind: input, shape index: {}]
  %s1 = inlined_call_operand.vmem [shape: bf16[16,68], index: 1, kind: input, shape index: {}]
  %s2 = inlined_call_operand.vmem [shape: bf16[48,160], index: 2, kind: input, shape index: {}]
  %s3 = inlined_call_operand.vmem [shape: f32[48,1], index: 3, kind: input, shape index: {}]
  %s4 = inlined_call_operand.hbm [shape: f32[2,48,64], index: 4, kind: output, shape index: {}]
  %s5 = sld [smem:[#allocation0]]
  $region49: #{upsample_forward.1} parent=0
    _
  %s7 = ssub.s32 1, %s5
  %s8 = scalar_select 0, %s7, %s5
  $region1: #{upsample_forward.1} parent=0
    #allocation4 [shape = 'u8[49152]{0}', space=vmem, size = 0xc000, scoped, tag = 'output window, operand 0']
    #allocation5 [shape = 's32[2]{0}', space=sflag, size = 0x8, scoped, tag = 'scoped memory for upsample_forward.1']
    %9 = vsyncpa [#allocation5], 0
    %s10 = scalar_lea.sflag [#allocation5], 1
    %11 = vsyncpa %s10, 0
    loop: start=0, step=1, limit=4
    $region2: #{upsample_forward.1} parent=1 // loop_pre_header
      _
    $region3: #{upsample_forward.1} parent=1 // loop_header
      %s13 = sphi 0, %s17
      %p14 = scmp.ge.s32.totalorder %s13, 4
      %s23 = sphi 0, %s25
      %s26 = sphi 0, %s23
      %s27 = sphi 0, %s26
      %s43 = sphi 0, %s27
      %s47 = sphi 0, %s47
      %s49 = sphi 0, %s47
      %s50 = sphi 0, %s49
      %s64 = sphi 0, %s50
      %s68 = sphi 0, %s68
      %s70 = sphi 0, %s68
      %s71 = sphi 0, %s70
      %s85 = sphi 0, %s71
      %s89 = sphi 0, %s89
      %s91 = sphi 0, %s89
      %s92 = sphi 0, %s91
      %s106 = sphi 0, %s92
      %s112 = sphi 0, %s114
      %s115 = sphi 0, %s112
      %s116 = sphi 0, %s115
      %s132 = sphi 0, %s116
    $region4: #{upsample_forward.1} parent=1 // loop_header_branch
      %16 = sbr.rel (%p14) target = $region8
    $region5: #{upsample_forward.1} parent=1 // loop_body
      %s18 = ssub.s32 %s13, 1
      %s19 = ssub.s32 %s13, 2
      %s20 = sadd.s32 %s13, 1
      %s21 = ssub.s32 %s13, %s20
      %p22 = scmp.eq.s32.totalorder %s21, 0
      %s24 = sadd.s32 %s23, 1
      %s25 = scalar_select %p22, %s23, %s24
      %p28 = pneg %p22
      %p29 = scmp.eq.s32.totalorder %s13, 1
      %p30 = por %p28, %p29
      %p31 = scmp.ne.s32.totalorder %s23, %s26
      %p32 = scmp.eq.s32.totalorder %s13, 0
      %p33 = por %p31, %p32
      %p34 = scmp.ne.s32.totalorder %s23, %s26
      %p35 = scmp.eq.s32.totalorder %s18, 1
      %p36 = por %p34, %p35
      %p37 = scmp.ne.s32.totalorder %s26, %s27
      %p38 = scmp.eq.s32.totalorder %s18, 0
      %p39 = por %p37, %p38
      %p40 = scmp.ne.s32.totalorder %s26, %s27
      %p41 = scmp.eq.s32.totalorder %s19, 1
      %p42 = por %p40, %p41
      %p44 = scmp.ne.s32.totalorder %s27, %s43
      %p45 = scmp.eq.s32.totalorder %s19, 0
      %p46 = por %p44, %p45
      %s48 = sadd.s32 %s47, 1
      %p51 = scmp.eq.s32.totalorder %s13, 1
      %p52 = scmp.ne.s32.totalorder %s47, %s49
      %p53 = scmp.eq.s32.totalorder %s13, 0
      %p54 = por %p52, %p53
      %p55 = scmp.ne.s32.totalorder %s47, %s49
      %p56 = scmp.eq.s32.totalorder %s18, 1
      %p57 = por %p55, %p56
      %p58 = scmp.ne.s32.totalorder %s49, %s50
      %p59 = scmp.eq.s32.totalorder %s18, 0
      %p60 = por %p58, %p59
      %p61 = scmp.ne.s32.totalorder %s49, %s50
      %p62 = scmp.eq.s32.totalorder %s19, 1
      %p63 = por %p61, %p62
      %p65 = scmp.ne.s32.totalorder %s50, %s64
      %p66 = scmp.eq.s32.totalorder %s19, 0
      %p67 = por %p65, %p66
      %s69 = sadd.s32 %s68, 1
      %p72 = scmp.eq.s32.totalorder %s13, 1
      %p73 = scmp.ne.s32.totalorder %s68, %s70
      %p74 = scmp.eq.s32.totalorder %s13, 0
      %p75 = por %p73, %p74
      %p76 = scmp.ne.s32.totalorder %s68, %s70
      %p77 = scmp.eq.s32.totalorder %s18, 1
      %p78 = por %p76, %p77
      %p79 = scmp.ne.s32.totalorder %s70, %s71
      %p80 = scmp.eq.s32.totalorder %s18, 0
      %p81 = por %p79, %p80
      %p82 = scmp.ne.s32.totalorder %s70, %s71
      %p83 = scmp.eq.s32.totalorder %s19, 1
      %p84 = por %p82, %p83
      %p86 = scmp.ne.s32.totalorder %s71, %s85
      %p87 = scmp.eq.s32.totalorder %s19, 0
      %p88 = por %p86, %p87
      %s90 = sadd.s32 %s89, 1
      %p93 = scmp.eq.s32.totalorder %s13, 1
      %p94 = scmp.ne.s32.totalorder %s89, %s91
      %p95 = scmp.eq.s32.totalorder %s13, 0
      %p96 = por %p94, %p95
      %p97 = scmp.ne.s32.totalorder %s89, %s91
      %p98 = scmp.eq.s32.totalorder %s18, 1
      %p99 = por %p97, %p98
      %p100 = scmp.ne.s32.totalorder %s91, %s92
      %p101 = scmp.eq.s32.totalorder %s18, 0
      %p102 = por %p100, %p101
      %p103 = scmp.ne.s32.totalorder %s91, %s92
      %p104 = scmp.eq.s32.totalorder %s19, 1
      %p105 = por %p103, %p104
      %p107 = scmp.ne.s32.totalorder %s92, %s106
      %p108 = scmp.eq.s32.totalorder %s19, 0
      %p109 = por %p107, %p108
      %s110 = ssub.s32 %s13, %s20
      %p111 = scmp.eq.s32.totalorder %s110, 0
      %s113 = sadd.s32 %s112, 1
      %s114 = scalar_select %p111, %s112, %s113
      %p117 = pneg %p111
      %p118 = scmp.eq.s32.totalorder %s13, 1
      %p119 = por %p117, %p118
      %p120 = scmp.ne.s32.totalorder %s112, %s115
      %p121 = scmp.eq.s32.totalorder %s13, 0
      %p122 = por %p120, %p121
      %p123 = scmp.ne.s32.totalorder %s112, %s115
      %p124 = scmp.eq.s32.totalorder %s18, 1
      %p125 = por %p123, %p124
      %p126 = scmp.ne.s32.totalorder %s115, %s116
      %p127 = scmp.eq.s32.totalorder %s18, 0
      %p128 = por %p126, %p127
      %p129 = scmp.ne.s32.totalorder %s115, %s116
      %p130 = scmp.eq.s32.totalorder %s19, 1
      %p131 = por %p129, %p130
      %p133 = scmp.ne.s32.totalorder %s116, %s132
      %p134 = scmp.eq.s32.totalorder %s19, 0
      %p135 = por %p133, %p134
      %p136 = scmp.le.s32.totalorder 1, %s13
      %p137 = scmp.lt.s32.totalorder %s13, 3
      %p138 = pnand %p136, %p137
      %p139 = pneg %p138
      // Predicated region
      $region9: #{upsample_forward.1} parent=5 // pred_check
        _
      $region10: #{upsample_forward.1} parent=5 // pred_check_branch
        %141 = sbr.rel (%p138) target = $region12
      $region11: #{upsample_forward.1} parent=5 // pred_region
        %s142 = ssub.s32 %s13, 1
        // Predicated region
        $region13: #{upsample_forward.1} parent=11 // pred_check
          %p143 = pneg %p60
        $region14: #{upsample_forward.1} parent=11 // pred_check_branch
          %145 = sbr.rel (%p143) target = $region16
        $region15: #{upsample_forward.1} parent=11 // pred_region
          _
        $region16: #{upsample_forward.1} parent=11 // pred_fallthru
          _
        // Predicated region
        $region17: #{upsample_forward.1} parent=11 // pred_check
          %p146 = pneg %p81
        $region18: #{upsample_forward.1} parent=11 // pred_check_branch
          %148 = sbr.rel (%p146) target = $region20
        $region19: #{upsample_forward.1} parent=11 // pred_region
          _
        $region20: #{upsample_forward.1} parent=11 // pred_fallthru
          _
        // Predicated region
        $region21: #{upsample_forward.1} parent=11 // pred_check
          %p149 = pneg %p102
        $region22: #{upsample_forward.1} parent=11 // pred_check_branch
          %151 = sbr.rel (%p149) target = $region24
        $region23: #{upsample_forward.1} parent=11 // pred_region
          _
        $region24: #{upsample_forward.1} parent=11 // pred_fallthru
          _
      $region12: #{upsample_forward.1} parent=5 // pred_fallthru
        _
      %p152 = scmp.lt.s32.totalorder %s13, 2
      // Predicated region
      $region25: #{upsample_forward.1} parent=5 // pred_check
        %p153 = pneg %p152
      $region26: #{upsample_forward.1} parent=5 // pred_check_branch
        %155 = sbr.rel (%p153) target = $region28
      $region27: #{upsample_forward.1} parent=5 // pred_region
        // Predicated region
        $region29: #{upsample_forward.1} parent=27 // pred_check
          %p156 = pneg %p33
        $region30: #{upsample_forward.1} parent=27 // pred_check_branch
          %158 = sbr.rel (%p156) target = $region32
        $region31: #{upsample_forward.1} parent=27 // pred_region
          %p159 = scmp.lt.s32.totalorder %s13, 1
          %s160 = scalar_select %p159, %s13, 1
          %s161 = smul.addr %s160, 4
          %s162 = smul.addr %s161, 8
          %s163 = scalar_lea.vmem %s0, %s162
        $region32: #{upsample_forward.1} parent=27 // pred_fallthru
          _
      $region28: #{upsample_forward.1} parent=5 // pred_fallthru
        _
      %p164 = scmp.le.s32.totalorder 1, %s13
      %p165 = scmp.lt.s32.totalorder %s13, 3
      %p166 = pnand %p164, %p165
      %p167 = pneg %p166
      // Predicated region
      $region33: #{upsample_forward.1} parent=5 // pred_check
        _
      $region34: #{upsample_forward.1} parent=5 // pred_check_branch
        %169 = sbr.rel (%p166) target = $region36
      $region35: #{upsample_forward.1} parent=5 // pred_region
        %s170 = ssub.s32 %s13, 1
        %p171 = scmp.lt.s32.totalorder %s18, 1
        %s172 = scalar_select %p171, %s18, 1
        %s173 = smul.addr %s172, 4
        %s174 = smul.addr %s173, 8
        %s175 = scalar_lea.vmem %s0, %s174
        %p176 = pneg %p39
        %p177 = pneg %p36
        %p178 = pneg %p60
        %p179 = pneg %p57
        %p180 = pneg %p81
        %p181 = pneg %p78
        %p182 = pneg %p102
        %p183 = pneg %p99
        %p184 = pneg %p128
        %p185 = pneg %p125
        %s186 = sand.u32 %s115, 1
        %s187 = scalar_lea.sflag [#allocation5], %s186
        %s188 = sand.u32 %s115, 1
        %s189 = smul.addr %s188, 48
        %s190 = scalar_lea.vmem [#allocation4], %s189
        %p191 = scmp.lt.s32.totalorder %s18, 1
        %s192 = scalar_select %p191, %s18, 1
        %s193 = smul.addr %s192, 4
        %s194 = smul.addr %s193, 8
        %s195 = scalar_lea.vmem %s0, %s194
        %v197 = vld [vmem:[%s195] sm:$0xff]
        %v198 = vld [vmem:[%s195 + $0x8] sm:$0xff]
        %v199 = vld [vmem:[%s195 + $0x10] sm:$0xff]
        %v200 = vld [vmem:[%s195 + $0x18] sm:$0xff]
        %v201 = vpack.c.bf16 %v198, %v197
        %v202 = vpack.c.bf16 %v200, %v199
        %v203 = vld [vmem:[%s1] sm:$0xf]
        %v204 = vld [vmem:[%s1 + $0x4] sm:$0xf]
        %v207 = vunpack.c.l.b16 %v203
        %v208 = vunpack.c.l.b16 %v204
        %v209 = vpack.c.b16 %v208, %v207
        %vm211 = vcmask 130048
        %v213 = vsel %vm211, %v201, 0
        %v216 = vsel %vm211, %v202, 0
        %218 = vmatprep.subr.bf16.mxu0 0
        %219 = vmatpush1.bf16.msra.mxu0 %v209
        %220 = vmatprep.subr.bf16.mxu0 0
        %221 = vmatpush1.bf16.msra.mxu0 0
        %222 = vmatprep.subr.bf16.mxu0 0
        %223 = vmatpush1.bf16.msra.mxu0 0
        %224 = vmatprep.subr.bf16.mxu0 0
        %225 = vmatpush1.bf16.msra.mxu0 0
        %226 = vmatprep.subr.bf16.mxu0 0
        %227 = vmatpush1.bf16.msra.mxu0 0
        %228 = vmatprep.subr.bf16.mxu0 0
        %229 = vmatpush1.bf16.msra.mxu0 0
        %230 = vmatprep.subr.bf16.mxu0 0
        %231 = vmatpush1.bf16.msra.mxu0 0
        %232 = vmatprep.subr.bf16.mxu0 0
        %233 = vmatpush1.bf16.msra.mxu0 0
        %234 = vmatprep.subr.bf16.mxu0 0
        %235 = vmatpush1.bf16.msra.mxu0 0
        %236 = vmatprep.subr.bf16.mxu0 0
        %237 = vmatpush1.bf16.msra.mxu0 0
        %238 = vmatprep.subr.bf16.mxu0 0
        %239 = vmatpush1.bf16.msra.mxu0 0
        %240 = vmatprep.subr.bf16.mxu0 0
        %241 = vmatpush1.bf16.msra.mxu0 0
        %242 = vmatprep.subr.bf16.mxu0 0
        %243 = vmatpush1.bf16.msra.mxu0 0
        %244 = vmatprep.subr.bf16.mxu0 0
        %245 = vmatpush1.bf16.msra.mxu0 0
        %246 = vmatprep.subr.bf16.mxu0 0
        %247 = vmatpush1.bf16.msra.mxu0 0
        %248 = vmatprep.subr.bf16.mxu0 0
        %249 = vmatpush1.bf16.msra.mxu0 0
        %250 = vmatprep.mubr.bf16.mxu0 0
        %251 = vmatmul.mubr.bf16.gmra.mrb[0].mxu0 %v213
        %v252 = vpop.f32.mrb[0].mxu0
        %v253 = vadd.f32 0.0, %v252
        %v254 = vpop.f32.mrb[0].mxu0
        %v255 = vpop.f32.mrb[0].mxu0
        %v256 = vadd.f32 0.0, %v255
        %v257 = vpop.f32.mrb[0].mxu0
        %258 = vmatprep.mubr.bf16.mxu0 0
        %259 = vmatmul.mubr.bf16.gmra.mrb[0].mxu0 %v216
        %v260 = vpop.f32.mrb[0].mxu0
        %v261 = vadd.f32 0.0, %v260
        %v262 = vpop.f32.mrb[0].mxu0
        %v263 = vpop.f32.mrb[0].mxu0
        %v264 = vadd.f32 0.0, %v263
        %v265 = vpop.f32.mrb[0].mxu0
        %266 = vdwg.mxu0
        %v267 = vpack.c.bf16 %v256, %v253
        %v268 = vpack.c.bf16 %v264, %v261
        %vm269 = vcmask 556032
        %270 = vst.msk [vmem:[#allocation2] sm:$0xff] %vm269, %v267
        %271 = vst.msk [vmem:[#allocation2 + $0x8] sm:$0xff] %vm269, %v268
        %v272 = vld [vmem:[#allocation2] sm:$0xff]
        %v273 = vld [vmem:[#allocation2 + $0x8] sm:$0xff]
        %vm274 = vcmask 523264
        %275 = vst.msk [vmem:[#allocation3] sm:$0xff] %vm274, %v272
        %276 = vst.msk [vmem:[#allocation3 + $0x8] sm:$0xff] %vm274, %v273
        %v277 = vld [vmem:[#allocation2] sm:$0xff]
        %v278 = vld [vmem:[#allocation2 + $0x8] sm:$0xff]
        %281 = vrot.lane.b32.xlu0 %v277, 127
        %v282 = vpop.permute.xlu0 %281
        %283 = vrot.lane.b32.xlu0 %v278, 127
        %v284 = vpop.permute.xlu0 %283
        %287 = vst.msk [vmem:[#allocation3 + $0x10] sm:$0xff] %vm274, %v282
        %288 = vst.msk [vmem:[#allocation3 + $0x18] sm:$0xff] %vm274, %v284
        %v289 = vld [vmem:[#allocation2] sm:$0xff]
        %v290 = vld [vmem:[#allocation2 + $0x8] sm:$0xff]
        %293 = vrot.lane.b32.xlu0 %v289, 126
        %v294 = vpop.permute.xlu0 %293
        %295 = vrot.lane.b32.xlu0 %v290, 126
        %v296 = vpop.permute.xlu0 %295
        %299 = vst.msk [vmem:[#allocation3 + $0x20] sm:$0xff] %vm274, %v294
        %300 = vst.msk [vmem:[#allocation3 + $0x28] sm:$0xff] %vm274, %v296
        %v301 = vld [vmem:[#allocation2] sm:$0xff]
        %v302 = vld [vmem:[#allocation2 + $0x8] sm:$0xff]
        %305 = vrot.lane.b32.xlu0 %v301, 125
        %v306 = vpop.permute.xlu0 %305
        %307 = vrot.lane.b32.xlu0 %v302, 125
        %v308 = vpop.permute.xlu0 %307
        %311 = vst.msk [vmem:[#allocation3 + $0x30] sm:$0xff] %vm274, %v306
        %312 = vst.msk [vmem:[#allocation3 + $0x38] sm:$0xff] %vm274, %v308
        %v313 = vld [vmem:[#allocation2] sm:$0xff]
        %v314 = vld [vmem:[#allocation2 + $0x8] sm:$0xff]
        %317 = vrot.lane.b32.xlu0 %v313, 124
        %v318 = vpop.permute.xlu0 %317
        %319 = vrot.lane.b32.xlu0 %v314, 124
        %v320 = vpop.permute.xlu0 %319
        %323 = vst.msk [vmem:[#allocation3 + $0x40] sm:$0xff] %vm274, %v318
        %324 = vst.msk [vmem:[#allocation3 + $0x48] sm:$0xff] %vm274, %v320
        %v325 = vld [vmem:[%s2] sm:$0xff]
        %v326 = vld [vmem:[%s2 + $0x8] sm:$0xff]
        %v327 = vld [vmem:[%s2 + $0x10] sm:$0xff]
        %v328 = vld [vmem:[%s2 + $0x18] sm:$0xff]
        %v329 = vld [vmem:[%s2 + $0x20] sm:$0xff]
        %v330 = vld [vmem:[%s2 + $0x28] sm:$0xff]
        %v331 = vld [vmem:[#allocation3] sm:$0xff]
        %v332 = vld [vmem:[#allocation3 + $0x8] sm:$0xff]
        %v333 = vld [vmem:[#allocation3 + $0x10] sm:$0xff]
        %v334 = vld [vmem:[#allocation3 + $0x18] sm:$0xff]
        %v335 = vld [vmem:[#allocation3 + $0x20] sm:$0xff]
        %v336 = vld [vmem:[#allocation3 + $0x28] sm:$0xff]
        %v337 = vld [vmem:[#allocation3 + $0x30] sm:$0xff]
        %v338 = vld [vmem:[#allocation3 + $0x38] sm:$0xff]
        %v339 = vld [vmem:[#allocation3 + $0x40] sm:$0xff]
        %v340 = vld [vmem:[#allocation3 + $0x48] sm:$0xff]
        %v341 = vld [vmem:[%s3] sm:$0xff]
        %v342 = vld [vmem:[%s3 + $0x8] sm:$0xff]
        %v343 = vld [vmem:[%s3 + $0x10] sm:$0xff]
        %v344 = vld [vmem:[%s3 + $0x18] sm:$0xff]
        %v345 = vld [vmem:[%s3 + $0x20] sm:$0xff]
        %v346 = vld [vmem:[%s3 + $0x28] sm:$0xff]
        %348 = vset.pattern.permute.xlu0 0
        %349 = vperm.xlu0 %348, %v341
        %v350 = vpop.permute.xlu0 %349
        %353 = vset.pattern.permute.xlu0 0
        %354 = vperm.xlu0 %353, %v342
        %v355 = vpop.permute.xlu0 %354
        %358 = vset.pattern.permute.xlu0 0
        %359 = vperm.xlu0 %358, %v343
        %v360 = vpop.permute.xlu0 %359
        %363 = vset.pattern.permute.xlu0 0
        %364 = vperm.xlu0 %363, %v344
        %v365 = vpop.permute.xlu0 %364
        %368 = vset.pattern.permute.xlu0 0
        %369 = vperm.xlu0 %368, %v345
        %v370 = vpop.permute.xlu0 %369
        %373 = vset.pattern.permute.xlu0 0
        %374 = vperm.xlu0 %373, %v346
        %v375 = vpop.permute.xlu0 %374
        %v383 = vunpack.c.l.b16 %v325
        %v384 = vunpack.c.h.b16 %v325
        %v385 = vunpack.c.l.b16 %v326
        %v386 = vunpack.c.h.b16 %v326
        %v387 = vunpack.c.l.b16 %v327
        %v388 = vunpack.c.h.b16 %v327
        %v389 = vunpack.c.l.b16 %v328
        %v390 = vunpack.c.h.b16 %v328
        %v391 = vunpack.c.l.b16 %v329
        %v392 = vunpack.c.h.b16 %v329
        %v393 = vunpack.c.l.b16 %v330
        %v394 = vunpack.c.h.b16 %v330
        %v395 = vpack.c.b16 %v385, %v383
        %v396 = vpack.c.b16 %v386, %v384
        %v397 = vpack.c.b16 %v389, %v387
        %v398 = vpack.c.b16 %v390, %v388
        %v399 = vpack.c.b16 %v393, %v391
        %v400 = vpack.c.b16 %v394, %v392
        %vm404 = vcmask 261120
        %v406 = vsel %vm404, %v396, 0
        %v409 = vsel %vm404, %v398, 0
        %v412 = vsel %vm404, %v400, 0
        %414 = vmatprep.subr.bf16.mxu0 0
        %415 = vmatpush1.bf16.msra.mxu0 %v331
        %416 = vmatprep.subr.bf16.mxu0 0
        %417 = vmatpush1.bf16.msra.mxu0 %v332
        %418 = vmatprep.subr.bf16.mxu0 0
        %419 = vmatpush1.bf16.msra.mxu0 %v333
        %420 = vmatprep.subr.bf16.mxu0 0
        %421 = vmatpush1.bf16.msra.mxu0 %v334
        %422 = vmatprep.subr.bf16.mxu0 0
        %423 = vmatpush1.bf16.msra.mxu0 %v335
        %424 = vmatprep.subr.bf16.mxu0 0
        %425 = vmatpush1.bf16.msra.mxu0 %v336
        %426 = vmatprep.subr.bf16.mxu0 0
        %427 = vmatpush1.bf16.msra.mxu0 %v337
        %428 = vmatprep.subr.bf16.mxu0 0
        %429 = vmatpush1.bf16.msra.mxu0 %v338
        %430 = vmatprep.subr.bf16.mxu0 0
        %431 = vmatpush1.bf16.msra.mxu0 %v339
        %432 = vmatprep.subr.bf16.mxu0 0
        %433 = vmatpush1.bf16.msra.mxu0 %v340
        %434 = vmatprep.subr.bf16.mxu0 0
        %435 = vmatpush1.bf16.msra.mxu0 0
        %436 = vmatprep.subr.bf16.mxu0 0
        %437 = vmatpush1.bf16.msra.mxu0 0
        %438 = vmatprep.subr.bf16.mxu0 0
        %439 = vmatpush1.bf16.msra.mxu0 0
        %440 = vmatprep.subr.bf16.mxu0 0
        %441 = vmatpush1.bf16.msra.mxu0 0
        %442 = vmatprep.subr.bf16.mxu0 0
        %443 = vmatpush1.bf16.msra.mxu0 0
        %444 = vmatprep.subr.bf16.mxu0 0
        %445 = vmatpush1.bf16.msra.mxu0 0
        %446 = vmatprep.mubr.bf16.mxu0 %v406
        %447 = vmatmul.mubr.bf16.gmra.mrb[0].mxu0 %v395
        %v448 = vpop.f32.mrb[0].mxu0
        %v449 = vadd.f32 %v350, %v448
        %v450 = vpop.f32.mrb[0].mxu0
        %v451 = vpop.f32.mrb[0].mxu0
        %v452 = vadd.f32 %v355, %v451
        %v453 = vpop.f32.mrb[0].mxu0
        %454 = vmatprep.mubr.bf16.mxu0 %v409
        %455 = vmatmul.mubr.bf16.gmra.mrb[0].mxu0 %v397
        %v456 = vpop.f32.mrb[0].mxu0
        %v457 = vadd.f32 %v360, %v456
        %v458 = vpop.f32.mrb[0].mxu0
        %v459 = vpop.f32.mrb[0].mxu0
        %v460 = vadd.f32 %v365, %v459
        %v461 = vpop.f32.mrb[0].mxu0
        %462 = vmatprep.mubr.bf16.mxu0 %v412
        %463 = vmatmul.mubr.bf16.gmra.mrb[0].mxu0 %v399
        %v464 = vpop.f32.mrb[0].mxu0
        %v465 = vadd.f32 %v370, %v464
        %v466 = vpop.f32.mrb[0].mxu0
        %v467 = vpop.f32.mrb[0].mxu0
        %v468 = vadd.f32 %v375, %v467
        %v469 = vpop.f32.mrb[0].mxu0
        %470 = vdwg.mxu0
        %471 = vst.msk [vmem:[%s190] sm:$0xff] %vm274, %v449
        %472 = vst.msk [vmem:[%s190 + $0x8] sm:$0xff] %vm274, %v452
        %473 = vst.msk [vmem:[%s190 + $0x10] sm:$0xff] %vm274, %v457
        %474 = vst.msk [vmem:[%s190 + $0x18] sm:$0xff] %vm274, %v460
        %475 = vst.msk [vmem:[%s190 + $0x20] sm:$0xff] %vm274, %v465
        %476 = vst.msk [vmem:[%s190 + $0x28] sm:$0xff] %vm274, %v468
        %s477 = sand.u32 %s115, 1
        %s478 = scalar_lea.sflag [#allocation5], %s477
        %s479 = sand.u32 %s115, 1
        %s480 = smul.addr %s479, 48
        %s481 = scalar_lea.vmem [#allocation4], %s480
        // Predicated region
        $region37: #{upsample_forward.1} parent=35 // pred_check
          %p482 = pneg %p125
        $region38: #{upsample_forward.1} parent=35 // pred_check_branch
          %484 = sbr.rel (%p482) target = $region40
        $region39: #{upsample_forward.1} parent=35 // pred_region
          %s486 = ssub.s32 768, 768
          %487 = vsyncadd %s478, %s486
          %s488 = smul.addr %s18, 6
          %s489 = smul.addr %s488, 128
          %s490 = scalar_lea.hbm %s4, %s489
          %s491 = sshll.u32 %s481, 4
          %s492 = int_to_ptr.vmem [resolvable:$true] %s491
          %497 = dma.vmem_to_hbm [thread:$0]  %s492, 768, %s490, %s478, 128, 128, 8
        $region40: #{upsample_forward.1} parent=35 // pred_fallthru
          _
      $region36: #{upsample_forward.1} parent=5 // pred_fallthru
        _
      %p498 = scmp.le.s32.totalorder 2, %s13
      // Predicated region
      $region41: #{upsample_forward.1} parent=5 // pred_check
        %p499 = pneg %p498
      $region42: #{upsample_forward.1} parent=5 // pred_check_branch
        %501 = sbr.rel (%p499) target = $region44
      $region43: #{upsample_forward.1} parent=5 // pred_region
        %s502 = ssub.s32 %s13, 2
        // Predicated region
        $region45: #{upsample_forward.1} parent=43 // pred_check
          %p503 = pneg %p131
        $region46: #{upsample_forward.1} parent=43 // pred_check_branch
          %505 = sbr.rel (%p503) target = $region48
        $region47: #{upsample_forward.1} parent=43 // pred_region
          %s506 = sand.u32 %s116, 1
          %s507 = scalar_lea.sflag [#allocation5], %s506
          %s508 = sand.u32 %s116, 1
          %s509 = smul.addr %s508, 48
          %s510 = scalar_lea.vmem [#allocation4], %s509
          %511 = dma.done %s507, 768
        $region48: #{upsample_forward.1} parent=43 // pred_fallthru
          _
      $region44: #{upsample_forward.1} parent=5 // pred_fallthru
        _
    $region6: #{upsample_forward.1} parent=1 // loop_footer
      %s17 = sadd.s32 1, %s13
    $region7: #{upsample_forward.1} parent=1 // loop_footer_branch
      %12 = sbr.rel target = $region3
    $region8: #{upsample_forward.1} parent=1 // loop_exit
      _
    %512 = vsyncpa [#allocation5], 1
    %s513 = scalar_lea.sflag [#allocation5], 1
    %514 = vsyncpa %s513, 1

</llo_original>
